<compile_context>
chip_gen: v7x
topology: tpu7x:2x2x1
jax: 0.10.0
libtpu: 0.0.40
codegen_flags: <defaults>
</compile_context>

<pallas_src>
import jax
import jax.numpy as jnp
from jax.experimental import pallas as pl
from jax.experimental.pallas import tpu as pltpu

_TM_MAX = 32768  # rows per tile (lane axis); multiple of 128; ~1 MiB f32 input tile


def _sigmoid(z):
    # exp lowers to the EUP slot; exact divide keeps 1e-5 parity with the reference.
    return 1.0 / (1.0 + jnp.exp(-z))


def _mlp_kernel(x_ref, w1_ref, b1_ref, w2_ref, b2_ref, w3_ref, b3_ref, o_ref):
    # Lane-dense: features on sublanes, batch rows on lanes.
    x = x_ref[...]                                                         # (8, TM) f32
    h1 = _sigmoid(
        jnp.dot(w1_ref[...], x, preferred_element_type=jnp.float32) + b1_ref[...])   # (6, TM)
    h2 = _sigmoid(
        jnp.dot(w2_ref[...], h1, preferred_element_type=jnp.float32) + b2_ref[...])  # (4, TM)
    h3 = jnp.dot(w3_ref[...], h2, preferred_element_type=jnp.float32) + b3_ref[...]  # (1, TM)
    o_ref[...] = _sigmoid(h3)                              # unmasked, lane-dense store


def mlp_forward(x, params):
    """x: float32 [..., 8]  ->  [..., 1] (matches Model.forward)."""
    w1, b1, w2, b2, w3, b3 = params
    lead_shape = x.shape[:-1]
    m = 1
    for d in lead_shape:
        m *= d
    x2d = x.reshape(m, 8)

    # Tile size on the row (lane) axis: multiple of 128, capped at _TM_MAX.
    m128 = ((m + 127) // 128) * 128
    tm = min(_TM_MAX, m128)
    m_pad = ((m + tm - 1) // tm) * tm
    grid = (m_pad // tm,)

    # Lane-dense layout plumbing: pad rows, put the batch dim last -> (8, M_pad).
    xt = jnp.pad(x2d, ((0, m_pad - m), (0, 0))).T

    # Parameters: full-array blocks, constant index_map -> resident in VMEM.
    const = lambda a: pl.BlockSpec(a.shape, lambda i: (0, 0))

    out = pl.pallas_call(
        _mlp_kernel,
        out_shape=jax.ShapeDtypeStruct((1, m_pad), jnp.float32),
        grid=grid,
        in_specs=[
            pl.BlockSpec((8, tm), lambda i: (0, i)),   # x tile, lane-dense
            const(w1), const(b1), const(w2), const(b2), const(w3), const(b3),
        ],
        out_specs=pl.BlockSpec((1, tm), lambda i: (0, i)),
        compiler_params=pltpu.CompilerParams(
            dimension_semantics=("parallel",)),
    )(xt, w1, b1, w2, b2, w3, b3)

    return out[0, :m].reshape(*lead_shape, 1)


def init_params(key):
    """torch.nn.Linear-style init (uniform +/- 1/sqrt(fan_in)).

    Weights are stored PyTorch-style (out_features, in_features); biases are
    (out_features, 1) columns so they lane-broadcast against (out, TM) tiles.
    """
    def linear(key, fan_in, fan_out):
        kw, kb = jax.random.split(key)
        bound = 1.0 / jnp.sqrt(jnp.float32(fan_in))
        w = jax.random.uniform(kw, (fan_out, fan_in), jnp.float32, -bound, bound)
        b = jax.random.uniform(kb, (fan_out, 1), jnp.float32, -bound, bound)
        return w, b

    k1, k2, k3 = jax.random.split(key, 3)
    w1, b1 = linear(k1, 8, 6)
    w2, b2 = linear(k2, 6, 4)
    w3, b3 = linear(k3, 4, 1)
    return (w1, b1, w2, b2, w3, b3)


if __name__ == "__main__":
    key = jax.random.PRNGKey(0)
    kp, kx = jax.random.split(key)
    params = init_params(kp)

    # "Multiple dimension input": batch=2, seq=4, features=8 -> output (2, 4, 1)
    x = jax.random.normal(kx, (2, 4, 8), dtype=jnp.float32)

    out = mlp_forward(x, params)
    jax.block_until_ready(out)

    # Pure-JAX reference.
    w1, b1, w2, b2, w3, b3 = params
    xr = x.reshape(-1, 8)
    h = 1.0 / (1.0 + jnp.exp(-(xr @ w1.T + b1[:, 0])))
    h = 1.0 / (1.0 + jnp.exp(-(h @ w2.T + b2[:, 0])))
    ref = (1.0 / (1.0 + jnp.exp(-(h @ w3.T + b3[:, 0])))).reshape(2, 4, 1)

    assert out.shape == (2, 4, 1), out.shape
    assert jnp.allclose(out, ref, atol=1e-5, rtol=1e-5), float(
        jnp.max(jnp.abs(out - ref)))

    print("KERNEL_OK")
</pallas_src>

<mosaic_0001>
module attributes {stable_mosaic.version = 11 : i64} {
  func.func @_mlp_kernel(%arg0: i32, %arg1: memref<8x128xf32, #tpu.memory_space<vmem>>, %arg2: memref<6x8xf32, #tpu.memory_space<vmem>>, %arg3: memref<6x1xf32, #tpu.memory_space<vmem>>, %arg4: memref<4x6xf32, #tpu.memory_space<vmem>>, %arg5: memref<4x1xf32, #tpu.memory_space<vmem>>, %arg6: memref<1x4xf32, #tpu.memory_space<vmem>>, %arg7: memref<1x1xf32, #tpu.memory_space<vmem>>, %arg8: memref<1x128xf32, #tpu.memory_space<vmem>>) attributes {dimension_semantics = [#tpu.dimension_semantics<parallel>], iteration_bounds = array<i64: 1>, scalar_prefetch = 0 : i64, scratch_operands = 0 : i64, tpu.core_type = #tpu.core_type<tc>, window_params = [{transform_indices = @transform_0, window_bounds = array<i64: 8, 128>}, {pipeline_mode = #tpu.pipeline_mode<synchronous>, transform_indices = @transform_1, window_bounds = array<i64: 6, 8>}, {pipeline_mode = #tpu.pipeline_mode<synchronous>, transform_indices = @transform_2, window_bounds = array<i64: 6, 1>}, {pipeline_mode = #tpu.pipeline_mode<synchronous>, transform_indices = @transform_3, window_bounds = array<i64: 4, 6>}, {pipeline_mode = #tpu.pipeline_mode<synchronous>, transform_indices = @transform_4, window_bounds = array<i64: 4, 1>}, {pipeline_mode = #tpu.pipeline_mode<synchronous>, transform_indices = @transform_5, window_bounds = array<i64: 1, 4>}, {pipeline_mode = #tpu.pipeline_mode<synchronous>, transform_indices = @transform_6, window_bounds = array<i64: 1, 1>}, {transform_indices = @transform_7, window_bounds = array<i64: 1, 128>}]} {
    %c0 = arith.constant 0 : index
    %c0_0 = arith.constant 0 : index
    %0 = vector.load %arg1[%c0, %c0_0] : memref<8x128xf32, #tpu.memory_space<vmem>>, vector<8x128xf32>
    %c0_1 = arith.constant 0 : index
    %c0_2 = arith.constant 0 : index
    %1 = vector.load %arg2[%c0_1, %c0_2] : memref<6x8xf32, #tpu.memory_space<vmem>>, vector<6x8xf32>
    %cst = arith.constant dense<0.000000e+00> : vector<6x128xf32>
    %2 = tpu.matmul %1, %0, %cst {dimension_numbers = #tpu.dot_dimension_numbers<[1], [0], [0], [1], [0, 0, 1, 1], [], []>} : vector<6x8xf32>, vector<8x128xf32>, vector<6x128xf32> -> vector<6x128xf32>
    %c0_3 = arith.constant 0 : index
    %c0_4 = arith.constant 0 : index
    %3 = vector.load %arg3[%c0_3, %c0_4] : memref<6x1xf32, #tpu.memory_space<vmem>>, vector<6x1xf32>
    %4 = vector.broadcast %3 : vector<6x1xf32> to vector<6x128xf32>
    %5 = arith.addf %2, %4 : vector<6x128xf32>
    %cst_5 = arith.constant 0.000000e+00 : f32
    %6 = vector.broadcast %cst_5 : f32 to vector<6x128xf32>
    %7 = arith.subf %6, %5 : vector<6x128xf32>
    %8 = math.exp %7 : vector<6x128xf32>
    %cst_6 = arith.constant 1.000000e+00 : f32
    %9 = vector.broadcast %cst_6 : f32 to vector<6x128xf32>
    %10 = arith.addf %9, %8 : vector<6x128xf32>
    %cst_7 = arith.constant 1.000000e+00 : f32
    %11 = vector.broadcast %cst_7 : f32 to vector<6x128xf32>
    %12 = arith.divf %11, %10 : vector<6x128xf32>
    %c0_8 = arith.constant 0 : index
    %c0_9 = arith.constant 0 : index
    %13 = vector.load %arg4[%c0_8, %c0_9] : memref<4x6xf32, #tpu.memory_space<vmem>>, vector<4x6xf32>
    %cst_10 = arith.constant dense<0.000000e+00> : vector<4x128xf32>
    %14 = tpu.matmul %13, %12, %cst_10 {dimension_numbers = #tpu.dot_dimension_numbers<[1], [0], [0], [1], [0, 0, 1, 1], [], []>} : vector<4x6xf32>, vector<6x128xf32>, vector<4x128xf32> -> vector<4x128xf32>
    %c0_11 = arith.constant 0 : index
    %c0_12 = arith.constant 0 : index
    %15 = vector.load %arg5[%c0_11, %c0_12] : memref<4x1xf32, #tpu.memory_space<vmem>>, vector<4x1xf32>
    %16 = vector.broadcast %15 : vector<4x1xf32> to vector<4x128xf32>
    %17 = arith.addf %14, %16 : vector<4x128xf32>
    %cst_13 = arith.constant 0.000000e+00 : f32
    %18 = vector.broadcast %cst_13 : f32 to vector<4x128xf32>
    %19 = arith.subf %18, %17 : vector<4x128xf32>
    %20 = math.exp %19 : vector<4x128xf32>
    %cst_14 = arith.constant 1.000000e+00 : f32
    %21 = vector.broadcast %cst_14 : f32 to vector<4x128xf32>
    %22 = arith.addf %21, %20 : vector<4x128xf32>
    %cst_15 = arith.constant 1.000000e+00 : f32
    %23 = vector.broadcast %cst_15 : f32 to vector<4x128xf32>
    %24 = arith.divf %23, %22 : vector<4x128xf32>
    %c0_16 = arith.constant 0 : index
    %c0_17 = arith.constant 0 : index
    %25 = vector.load %arg6[%c0_16, %c0_17] : memref<1x4xf32, #tpu.memory_space<vmem>>, vector<1x4xf32>
    %cst_18 = arith.constant dense<0.000000e+00> : vector<1x128xf32>
    %26 = tpu.matmul %25, %24, %cst_18 {dimension_numbers = #tpu.dot_dimension_numbers<[1], [0], [0], [1], [0, 0, 1, 1], [], []>} : vector<1x4xf32>, vector<4x128xf32>, vector<1x128xf32> -> vector<1x128xf32>
    %c0_19 = arith.constant 0 : index
    %c0_20 = arith.constant 0 : index
    %27 = vector.load %arg7[%c0_19, %c0_20] : memref<1x1xf32, #tpu.memory_space<vmem>>, vector<1x1xf32>
    %28 = vector.broadcast %27 : vector<1x1xf32> to vector<1x128xf32>
    %29 = arith.addf %26, %28 : vector<1x128xf32>
    %cst_21 = arith.constant 0.000000e+00 : f32
    %30 = vector.broadcast %cst_21 : f32 to vector<1x128xf32>
    %31 = arith.subf %30, %29 : vector<1x128xf32>
    %32 = math.exp %31 : vector<1x128xf32>
    %cst_22 = arith.constant 1.000000e+00 : f32
    %33 = vector.broadcast %cst_22 : f32 to vector<1x128xf32>
    %34 = arith.addf %33, %32 : vector<1x128xf32>
    %cst_23 = arith.constant 1.000000e+00 : f32
    %35 = vector.broadcast %cst_23 : f32 to vector<1x128xf32>
    %36 = arith.divf %35, %34 : vector<1x128xf32>
    %c0_24 = arith.constant 0 : index
    %c0_25 = arith.constant 0 : index
    %37 = vector.load %arg8[%c0_24, %c0_25] : memref<1x128xf32, #tpu.memory_space<vmem>>, vector<1x128xf32>
    tpu.vector_store %arg8[%c0_24, %c0_25], %36 {strides = array<i32>} : memref<1x128xf32, #tpu.memory_space<vmem>>, vector<1x128xf32>,
    return
  }
  func.func @transform_0(%arg0: i32) -> (i32, i32) {
    %c0_i32 = arith.constant 0 : i32
    %c0_i32_0 = arith.constant 0 : i32
    return %c0_i32, %arg0 : i32, i32
  }
  func.func @transform_1(%arg0: i32) -> (i32, i32) {
    %c0_i32 = arith.constant 0 : i32
    %c0_i32_0 = arith.constant 0 : i32
    %c0_i32_1 = arith.constant 0 : i32
    return %c0_i32, %c0_i32_0 : i32, i32
  }
  func.func @transform_2(%arg0: i32) -> (i32, i32) {
    %c0_i32 = arith.constant 0 : i32
    %c0_i32_0 = arith.constant 0 : i32
    %c0_i32_1 = arith.constant 0 : i32
    return %c0_i32, %c0_i32_0 : i32, i32
  }
  func.func @transform_3(%arg0: i32) -> (i32, i32) {
    %c0_i32 = arith.constant 0 : i32
    %c0_i32_0 = arith.constant 0 : i32
    %c0_i32_1 = arith.constant 0 : i32
    return %c0_i32, %c0_i32_0 : i32, i32
  }
  func.func @transform_4(%arg0: i32) -> (i32, i32) {
    %c0_i32 = arith.constant 0 : i32
    %c0_i32_0 = arith.constant 0 : i32
    %c0_i32_1 = arith.constant 0 : i32
    return %c0_i32, %c0_i32_0 : i32, i32
  }
  func.func @transform_5(%arg0: i32) -> (i32, i32) {
    %c0_i32 = arith.constant 0 : i32
    %c0_i32_0 = arith.constant 0 : i32
    %c0_i32_1 = arith.constant 0 : i32
    return %c0_i32, %c0_i32_0 : i32, i32
  }
  func.func @transform_6(%arg0: i32) -> (i32, i32) {
    %c0_i32 = arith.constant 0 : i32
    %c0_i32_0 = arith.constant 0 : i32
    %c0_i32_1 = arith.constant 0 : i32
    return %c0_i32, %c0_i32_0 : i32, i32
  }
  func.func @transform_7(%arg0: i32) -> (i32, i32) {
    %c0_i32 = arith.constant 0 : i32
    %c0_i32_0 = arith.constant 0 : i32
    return %c0_i32, %arg0 : i32, i32
  }
}

</mosaic_0001>

<llo_original>
// kernel: tpu_custom_call.1
$region0: #{tpu_custom_call.1}
  #allocation0 [shape = 'u32[]', space=smem, size = 0x4, offset = 0x4, fixed_abs, tag = 'smem constant byte address 0x4 - core index']
  #allocation1 [shape = 'u32[144,128]{1,0:T(1,128)}', space=vmem, size = 0x12000, scoped, tag = 'internal scratch']
  #allocation2 [shape = 'f32[1,1]{1,0:T(1,128)S(1)}', space=vmem, size = 0x200, scoped, tag = 'scoped memory for tpu_custom_call.1']
  %s0 = inlined_call_operand.vmem [shape: f32[8,128], index: 0, kind: input, shape index: {}]
  %s1 = inlined_call_operand.vmem [shape: f32[6,8], index: 1, kind: input, shape index: {}]
  %s2 = inlined_call_operand.vmem [shape: f32[6,1], index: 2, kind: input, shape index: {}]
  %s3 = inlined_call_operand.vmem [shape: f32[4,6], index: 3, kind: input, shape index: {}]
  %s4 = inlined_call_operand.vmem [shape: f32[4,1], index: 4, kind: input, shape index: {}]
  %s5 = inlined_call_operand.vmem [shape: f32[1,4], index: 5, kind: input, shape index: {}]
  %s6 = inlined_call_operand.<no memory space> [shape: f32[1,1], index: 6, kind: input, shape index: {}]
  %s7 = inlined_call_operand.hbm [shape: f32[1,128], index: 7, kind: output, shape index: {}]
  %s8 = sld [smem:[#allocation0]]
  $region38: #{tpu_custom_call.1} parent=0
    _
  %s10 = ssub.s32 1, %s8
  %s11 = scalar_select 0, %s10, %s8
  %v12 = vstv %s6
  %13 = vst [vmem:[#allocation2] sm:$0x1] %v12
  $region1: #{tpu_custom_call.1} parent=0
    #allocation3 [shape = 'u8[512]{0}', space=vmem, size = 0x400, scoped, tag = 'output window, operand 0, single buffered']
    #allocation4 [shape = 's32[1]{0}', space=sflag, size = 0x4, scoped, tag = 'scoped memory for tpu_custom_call.1']
    %14 = vsyncpa [#allocation4], 0
    // Predicated region
    $region2: #{tpu_custom_call.1} parent=1 // pred_check
      _
    $region3: #{tpu_custom_call.1} parent=1 // pred_check_branch
      %16 = sbr.rel (0) target = $region5
    $region4: #{tpu_custom_call.1} parent=1 // pred_region
      _
    $region5: #{tpu_custom_call.1} parent=1 // pred_fallthru
      _
    // Predicated region
    $region6: #{tpu_custom_call.1} parent=1 // pred_check
      _
    $region7: #{tpu_custom_call.1} parent=1 // pred_check_branch
      %18 = sbr.rel (0) target = $region9
    $region8: #{tpu_custom_call.1} parent=1 // pred_region
      _
    $region9: #{tpu_custom_call.1} parent=1 // pred_fallthru
      _
    // Predicated region
    $region10: #{tpu_custom_call.1} parent=1 // pred_check
      _
    $region11: #{tpu_custom_call.1} parent=1 // pred_check_branch
      %20 = sbr.rel (0) target = $region13
    $region12: #{tpu_custom_call.1} parent=1 // pred_region
      _
    $region13: #{tpu_custom_call.1} parent=1 // pred_fallthru
      _
    // Predicated region
    $region14: #{tpu_custom_call.1} parent=1 // pred_check
      _
    $region15: #{tpu_custom_call.1} parent=1 // pred_check_branch
      %22 = sbr.rel (0) target = $region17
    $region16: #{tpu_custom_call.1} parent=1 // pred_region
      _
    $region17: #{tpu_custom_call.1} parent=1 // pred_fallthru
      _
    // Predicated region
    $region18: #{tpu_custom_call.1} parent=1 // pred_check
      _
    $region19: #{tpu_custom_call.1} parent=1 // pred_check_branch
      %24 = sbr.rel (0) target = $region21
    $region20: #{tpu_custom_call.1} parent=1 // pred_region
      _
    $region21: #{tpu_custom_call.1} parent=1 // pred_fallthru
      _
    // Predicated region
    $region22: #{tpu_custom_call.1} parent=1 // pred_check
      _
    $region23: #{tpu_custom_call.1} parent=1 // pred_check_branch
      %26 = sbr.rel (0) target = $region25
    $region24: #{tpu_custom_call.1} parent=1 // pred_region
      _
    $region25: #{tpu_custom_call.1} parent=1 // pred_fallthru
      _
    // Predicated region
    $region26: #{tpu_custom_call.1} parent=1 // pred_check
      _
    $region27: #{tpu_custom_call.1} parent=1 // pred_check_branch
      %28 = sbr.rel (0) target = $region29
    $region28: #{tpu_custom_call.1} parent=1 // pred_region
      _
    $region29: #{tpu_custom_call.1} parent=1 // pred_fallthru
      _
    %v29 = vld [vmem:[%s0] sm:$0xff]
    %v30 = vld [vmem:[%s1] sm:$0x3f]
    %v31 = vld [vmem:[%s2] sm:$0x3f]
    %33 = vset.pattern.permute.xlu0 0
    %34 = vperm.xlu0 %33, %v31
    %v35 = vpop.permute.xlu0 %34
    %vm37 = vcmask 64512
    %v39 = vsel %vm37, %v30, 0
    %41 = vmatprep.subr.mxu0 0.0
    %42 = vmatpush1.msra.mxu0 %v29
    %43 = vmatprep.subr.mxu0 0.0
    %44 = vmatpush1.msra.mxu0 0.0
    %45 = vmatprep.subr.mxu0 0.0
    %46 = vmatpush1.msra.mxu0 0.0
    %47 = vmatprep.subr.mxu0 0.0
    %48 = vmatpush1.msra.mxu0 0.0
    %49 = vmatprep.subr.mxu0 0.0
    %50 = vmatpush1.msra.mxu0 0.0
    %51 = vmatprep.subr.mxu0 0.0
    %52 = vmatpush1.msra.mxu0 0.0
    %53 = vmatprep.subr.mxu0 0.0
    %54 = vmatpush1.msra.mxu0 0.0
    %55 = vmatprep.subr.mxu0 0.0
    %56 = vmatpush1.msra.mxu0 0.0
    %57 = vmatprep.subr.mxu0 0.0
    %58 = vmatpush1.msra.mxu0 0.0
    %59 = vmatprep.subr.mxu0 0.0
    %60 = vmatpush1.msra.mxu0 0.0
    %61 = vmatprep.subr.mxu0 0.0
    %62 = vmatpush1.msra.mxu0 0.0
    %63 = vmatprep.subr.mxu0 0.0
    %64 = vmatpush1.msra.mxu0 0.0
    %65 = vmatprep.subr.mxu0 0.0
    %66 = vmatpush1.msra.mxu0 0.0
    %67 = vmatprep.subr.mxu0 0.0
    %68 = vmatpush1.msra.mxu0 0.0
    %69 = vmatprep.subr.mxu0 0.0
    %70 = vmatpush1.msra.mxu0 0.0
    %71 = vmatprep.subr.mxu0 0.0
    %72 = vmatpush1.msra.mxu0 0.0
    %73 = vmatprep.subr.mxu0 0.0
    %74 = vmatpush1.msra.mxu0 0.0
    %75 = vmatprep.subr.mxu0 0.0
    %76 = vmatpush1.msra.mxu0 0.0
    %77 = vmatprep.subr.mxu0 0.0
    %78 = vmatpush1.msra.mxu0 0.0
    %79 = vmatprep.subr.mxu0 0.0
    %80 = vmatpush1.msra.mxu0 0.0
    %81 = vmatprep.subr.mxu0 0.0
    %82 = vmatpush1.msra.mxu0 0.0
    %83 = vmatprep.subr.mxu0 0.0
    %84 = vmatpush1.msra.mxu0 0.0
    %85 = vmatprep.subr.mxu0 0.0
    %86 = vmatpush1.msra.mxu0 0.0
    %87 = vmatprep.subr.mxu0 0.0
    %88 = vmatpush1.msra.mxu0 0.0
    %89 = vmatprep.subr.mxu0 0.0
    %90 = vmatpush1.msra.mxu0 0.0
    %91 = vmatprep.subr.mxu0 0.0
    %92 = vmatpush1.msra.mxu0 0.0
    %93 = vmatprep.subr.mxu0 0.0
    %94 = vmatpush1.msra.mxu0 0.0
    %95 = vmatprep.subr.mxu0 0.0
    %96 = vmatpush1.msra.mxu0 0.0
    %97 = vmatprep.subr.mxu0 0.0
    %98 = vmatpush1.msra.mxu0 0.0
    %99 = vmatprep.subr.mxu0 0.0
    %100 = vmatpush1.msra.mxu0 0.0
    %101 = vmatprep.subr.mxu0 0.0
    %102 = vmatpush1.msra.mxu0 0.0
    %103 = vmatprep.subr.mxu0 0.0
    %104 = vmatpush1.msra.mxu0 0.0
    %105 = vmatprep.mubr.f32.mxu0 0.0
    %106 = vmatmul.mubr.f32.gmra.mrb[0].mxu0 %v39
    %v107 = vpop.f32.mrb[0].mxu0
    %v108 = vadd.f32 %v35, %v107
    %v109 = vpop.f32.mrb[0].mxu0
    %110 = vdwg.mxu0
    %v111 = vsub.f32 0.0, %v108
    %v112 = vmul.f32 %v111, 1.442695
    %v113 = vpow.pop %v112
    %v114 = vadd.f32 %v113, 1.0
    %v115 = vrcp.pop %v114
    %v116 = vmul.f32 1.0, %v115
    %v117 = vld [vmem:[%s3] sm:$0xf]
    %v118 = vld [vmem:[%s4] sm:$0xf]
    %120 = vset.pattern.permute.xlu0 0
    %121 = vperm.xlu0 %120, %v118
    %v122 = vpop.permute.xlu0 %121
    %vm124 = vcmask 48128
    %v126 = vsel %vm124, %v117, 0
    %vm128 = vcmask 1045504
    %v130 = vsel %vm128, %v116, 0
    %132 = vmatprep.subr.mxu0 0.0
    %133 = vmatpush1.msra.mxu0 %v130
    %134 = vmatprep.subr.mxu0 0.0
    %135 = vmatpush1.msra.mxu0 0.0
    %136 = vmatprep.subr.mxu0 0.0
    %137 = vmatpush1.msra.mxu0 0.0
    %138 = vmatprep.subr.mxu0 0.0
    %139 = vmatpush1.msra.mxu0 0.0
    %140 = vmatprep.subr.mxu0 0.0
    %141 = vmatpush1.msra.mxu0 0.0
    %142 = vmatprep.subr.mxu0 0.0
    %143 = vmatpush1.msra.mxu0 0.0
    %144 = vmatprep.subr.mxu0 0.0
    %145 = vmatpush1.msra.mxu0 0.0
    %146 = vmatprep.subr.mxu0 0.0
    %147 = vmatpush1.msra.mxu0 0.0
    %148 = vmatprep.subr.mxu0 0.0
    %149 = vmatpush1.msra.mxu0 0.0
    %150 = vmatprep.subr.mxu0 0.0
    %151 = vmatpush1.msra.mxu0 0.0
    %152 = vmatprep.subr.mxu0 0.0
    %153 = vmatpush1.msra.mxu0 0.0
    %154 = vmatprep.subr.mxu0 0.0
    %155 = vmatpush1.msra.mxu0 0.0
    %156 = vmatprep.subr.mxu0 0.0
    %157 = vmatpush1.msra.mxu0 0.0
    %158 = vmatprep.subr.mxu0 0.0
    %159 = vmatpush1.msra.mxu0 0.0
    %160 = vmatprep.subr.mxu0 0.0
    %161 = vmatpush1.msra.mxu0 0.0
    %162 = vmatprep.subr.mxu0 0.0
    %163 = vmatpush1.msra.mxu0 0.0
    %164 = vmatprep.subr.mxu0 0.0
    %165 = vmatpush1.msra.mxu0 0.0
    %166 = vmatprep.subr.mxu0 0.0
    %167 = vmatpush1.msra.mxu0 0.0
    %168 = vmatprep.subr.mxu0 0.0
    %169 = vmatpush1.msra.mxu0 0.0
    %170 = vmatprep.subr.mxu0 0.0
    %171 = vmatpush1.msra.mxu0 0.0
    %172 = vmatprep.subr.mxu0 0.0
    %173 = vmatpush1.msra.mxu0 0.0
    %174 = vmatprep.subr.mxu0 0.0
    %175 = vmatpush1.msra.mxu0 0.0
    %176 = vmatprep.subr.mxu0 0.0
    %177 = vmatpush1.msra.mxu0 0.0
    %178 = vmatprep.subr.mxu0 0.0
    %179 = vmatpush1.msra.mxu0 0.0
    %180 = vmatprep.subr.mxu0 0.0
    %181 = vmatpush1.msra.mxu0 0.0
    %182 = vmatprep.subr.mxu0 0.0
    %183 = vmatpush1.msra.mxu0 0.0
    %184 = vmatprep.subr.mxu0 0.0
    %185 = vmatpush1.msra.mxu0 0.0
    %186 = vmatprep.subr.mxu0 0.0
    %187 = vmatpush1.msra.mxu0 0.0
    %188 = vmatprep.subr.mxu0 0.0
    %189 = vmatpush1.msra.mxu0 0.0
    %190 = vmatprep.subr.mxu0 0.0
    %191 = vmatpush1.msra.mxu0 0.0
    %192 = vmatprep.subr.mxu0 0.0
    %193 = vmatpush1.msra.mxu0 0.0
    %194 = vmatprep.subr.mxu0 0.0
    %195 = vmatpush1.msra.mxu0 0.0
    %196 = vmatprep.mubr.f32.mxu0 0.0
    %197 = vmatmul.mubr.f32.gmra.mrb[0].mxu0 %v126
    %v198 = vpop.f32.mrb[0].mxu0
    %v199 = vadd.f32 %v122, %v198
    %v200 = vpop.f32.mrb[0].mxu0
    %201 = vdwg.mxu0
    %v202 = vsub.f32 0.0, %v199
    %v203 = vmul.f32 %v202, 1.442695
    %v204 = vpow.pop %v203
    %v205 = vadd.f32 %v204, 1.0
    %v206 = vrcp.pop %v205
    %v207 = vmul.f32 1.0, %v206
    %v208 = vld [vmem:[%s5] sm:$0x1]
    %v209 = vld [vmem:[#allocation2] sm:$0x1]
    %211 = vset.pattern.permute.xlu0 0
    %212 = vperm.xlu0 %211, %v209
    %v213 = vpop.permute.xlu0 %212
    %v215 = vlaneseq
    %v216 = vshrl.u32 %v215, 7
    %v217 = vsub.s32 0, %v216
    %v218 = vrot.slane %v213, %v217
    %vm219 = vcmask 31744
    %v221 = vsel %vm219, %v208, 0
    %vm223 = vcmask 1043456
    %v225 = vsel %vm223, %v207, 0
    %227 = vmatprep.subr.mxu0 0.0
    %228 = vmatpush1.msra.mxu0 %v225
    %229 = vmatprep.subr.mxu0 0.0
    %230 = vmatpush1.msra.mxu0 0.0
    %231 = vmatprep.subr.mxu0 0.0
    %232 = vmatpush1.msra.mxu0 0.0
    %233 = vmatprep.subr.mxu0 0.0
    %234 = vmatpush1.msra.mxu0 0.0
    %235 = vmatprep.subr.mxu0 0.0
    %236 = vmatpush1.msra.mxu0 0.0
    %237 = vmatprep.subr.mxu0 0.0
    %238 = vmatpush1.msra.mxu0 0.0
    %239 = vmatprep.subr.mxu0 0.0
    %240 = vmatpush1.msra.mxu0 0.0
    %241 = vmatprep.subr.mxu0 0.0
    %242 = vmatpush1.msra.mxu0 0.0
    %243 = vmatprep.subr.mxu0 0.0
    %244 = vmatpush1.msra.mxu0 0.0
    %245 = vmatprep.subr.mxu0 0.0
    %246 = vmatpush1.msra.mxu0 0.0
    %247 = vmatprep.subr.mxu0 0.0
    %248 = vmatpush1.msra.mxu0 0.0
    %249 = vmatprep.subr.mxu0 0.0
    %250 = vmatpush1.msra.mxu0 0.0
    %251 = vmatprep.subr.mxu0 0.0
    %252 = vmatpush1.msra.mxu0 0.0
    %253 = vmatprep.subr.mxu0 0.0
    %254 = vmatpush1.msra.mxu0 0.0
    %255 = vmatprep.subr.mxu0 0.0
    %256 = vmatpush1.msra.mxu0 0.0
    %257 = vmatprep.subr.mxu0 0.0
    %258 = vmatpush1.msra.mxu0 0.0
    %259 = vmatprep.subr.mxu0 0.0
    %260 = vmatpush1.msra.mxu0 0.0
    %261 = vmatprep.subr.mxu0 0.0
    %262 = vmatpush1.msra.mxu0 0.0
    %263 = vmatprep.subr.mxu0 0.0
    %264 = vmatpush1.msra.mxu0 0.0
    %265 = vmatprep.subr.mxu0 0.0
    %266 = vmatpush1.msra.mxu0 0.0
    %267 = vmatprep.subr.mxu0 0.0
    %268 = vmatpush1.msra.mxu0 0.0
    %269 = vmatprep.subr.mxu0 0.0
    %270 = vmatpush1.msra.mxu0 0.0
    %271 = vmatprep.subr.mxu0 0.0
    %272 = vmatpush1.msra.mxu0 0.0
    %273 = vmatprep.subr.mxu0 0.0
    %274 = vmatpush1.msra.mxu0 0.0
    %275 = vmatprep.subr.mxu0 0.0
    %276 = vmatpush1.msra.mxu0 0.0
    %277 = vmatprep.subr.mxu0 0.0
    %278 = vmatpush1.msra.mxu0 0.0
    %279 = vmatprep.subr.mxu0 0.0
    %280 = vmatpush1.msra.mxu0 0.0
    %281 = vmatprep.subr.mxu0 0.0
    %282 = vmatpush1.msra.mxu0 0.0
    %283 = vmatprep.subr.mxu0 0.0
    %284 = vmatpush1.msra.mxu0 0.0
    %285 = vmatprep.subr.mxu0 0.0
    %286 = vmatpush1.msra.mxu0 0.0
    %287 = vmatprep.subr.mxu0 0.0
    %288 = vmatpush1.msra.mxu0 0.0
    %289 = vmatprep.subr.mxu0 0.0
    %290 = vmatpush1.msra.mxu0 0.0
    %291 = vmatprep.mubr.f32.mxu0 0.0
    %292 = vmatmul.mubr.f32.gmra.mrb[0].mxu0 %v221
    %v293 = vpop.f32.mrb[0].mxu0
    %v294 = vadd.f32 %v218, %v293
    %v295 = vpop.f32.mrb[0].mxu0
    %296 = vdwg.mxu0
    %v297 = vsub.f32 0.0, %v294
    %v298 = vmul.f32 %v297, 1.442695
    %v299 = vpow.pop %v298
    %v300 = vadd.f32 %v299, 1.0
    %v301 = vrcp.pop %v300
    %v302 = vmul.f32 1.0, %v301
    %303 = vst [vmem:[#allocation3] sm:$0x1] %v302
    // Predicated region
    $region30: #{tpu_custom_call.1} parent=1 // pred_check
      _
    $region31: #{tpu_custom_call.1} parent=1 // pred_check_branch
      %305 = sbr.rel (0) target = $region33
    $region32: #{tpu_custom_call.1} parent=1 // pred_region
      %s307 = ssub.s32 16, 16
      %308 = vsyncadd [#allocation4], %s307
      %s310 = sshll.u32 [#allocation3], 4
      %s311 = int_to_ptr.vmem [resolvable:$true] %s310
      %313 = dma.vmem_to_hbm [thread:$0]  %s311, 16, %s7, [#allocation4]
    $region33: #{tpu_custom_call.1} parent=1 // pred_fallthru
      _
    // Predicated region
    $region34: #{tpu_custom_call.1} parent=1 // pred_check
      _
    $region35: #{tpu_custom_call.1} parent=1 // pred_check_branch
      %315 = sbr.rel (0) target = $region37
    $region36: #{tpu_custom_call.1} parent=1 // pred_region
      %316 = dma.done [#allocation4], 16
    $region37: #{tpu_custom_call.1} parent=1 // pred_fallthru
      _
    %317 = vsyncpa [#allocation4], 1

</llo_original>
